<compile_context>
chip_gen: v6e
topology: v6e:2x2x1
jax: 0.10.0
libtpu: 0.0.40
codegen_flags: <defaults>
</compile_context>

<pallas_src>
import functools
import math

import jax
import jax.numpy as jnp
from jax.experimental import pallas as pl
from jax.experimental.pallas import tpu as pltpu  # noqa: F401  (TPU backend)

# ---- problem sizes (small, consistent with the module) ----------------------
SEQ = 8          # sequence length
BATCH = 2        # batch size
EMBED = 32       # embed_dim
FF_DIM = 2 * EMBED
LN_EPS = 1e-5    # nn.LayerNorm default eps


# ---- in-kernel math helpers --------------------------------------------------
def _erf(z):
    # Abramowitz & Stegun 7.1.26 rational approximation (|err| < 1.5e-7).
    # mul / EUP-reciprocal / EUP-exp / where only -> always lowers on TPU.
    az = jnp.abs(z)
    t = pl.reciprocal(1.0 + 0.3275911 * az, approx=True)
    poly = t * (0.254829592 + t * (-0.284496736 + t * (1.421413741
               + t * (-1.453152027 + t * 1.061405429))))
    e = 1.0 - poly * jnp.exp(-az * az)
    return jnp.where(z >= 0.0, e, -e)


def _gelu_exact(x):
    # nn.GELU() default is the exact erf formulation.
    return 0.5 * x * (1.0 + _erf(x * (1.0 / math.sqrt(2.0))))


def _layer_norm_rows(h, g, b):
    mu = jnp.mean(h, axis=-1, keepdims=True)
    d = h - mu
    var = jnp.mean(d * d, axis=-1, keepdims=True)
    return d * jax.lax.rsqrt(var + LN_EPS) * g + b


# ---- Pallas kernel -----------------------------------------------------------
def transformer_block_kernel(x_ref, w_ref, wf2_ref, vec_ref, out_ref, *, batch):
    # x_ref   : (N, E)         tokens flattened from [S, B, E]; row r = s*B + b
    # w_ref   : (E, 4E + F)    [ Wqkv^T (E,3E) | Wo^T (E,E) | Wff1^T (E,F) ]
    # wf2_ref : (F, E)         Wff2^T
    # vec_ref : (8, 128)       rows: bqkv | bo | ln1_g | ln1_b | bf1 | bf2 | ln2_g | ln2_b
    # out_ref : (N, E)
    N, E = x_ref.shape
    F = wf2_ref.shape[0]

    x = x_ref[...]

    bqkv = vec_ref[0, 0:3 * E]
    bo   = vec_ref[1, 0:E]
    g1   = vec_ref[2, 0:E]
    be1  = vec_ref[3, 0:E]
    bf1  = vec_ref[4, 0:F]
    bf2  = vec_ref[5, 0:E]
    g2   = vec_ref[6, 0:E]
    be2  = vec_ref[7, 0:E]

    # ---- attention (num_heads=1): fused QKV projection, one MXU push -------
    qkv = jnp.dot(x, w_ref[:, 0:3 * E], preferred_element_type=jnp.float32) + bqkv
    q = qkv[:, 0:E]
    k = qkv[:, E:2 * E]
    v = qkv[:, 2 * E:3 * E]

    # single fused (N,N) score matmul over all tokens, masked to same batch.
    scale = 1.0 / math.sqrt(E)                        # head_dim == E (1 head)
    s = jax.lax.dot_general(q, k, (((1,), (1,)), ((), ())),
                            preferred_element_type=jnp.float32) * scale
    ri = jax.lax.broadcasted_iota(jnp.int32, (N, N), 0)
    ci = jax.lax.broadcasted_iota(jnp.int32, (N, N), 1)
    if batch & (batch - 1) == 0:                      # power-of-two batch
        bi = jax.lax.bitwise_and(ri, batch - 1)
        bj = jax.lax.bitwise_and(ci, batch - 1)
    else:
        bi = jax.lax.rem(ri, batch)
        bj = jax.lax.rem(ci, batch)
    same_batch = bi == bj
    # mask BEFORE the row-max / exp so cross-batch logits never enter softmax.
    s = jnp.where(same_batch, s, -jnp.inf)
    s = s - jnp.max(s, axis=-1, keepdims=True)
    p = jnp.exp(s)
    p = p * pl.reciprocal(jnp.sum(p, axis=-1, keepdims=True), approx=True)
    a = jnp.dot(p, v, preferred_element_type=jnp.float32)
    a = jnp.dot(a, w_ref[:, 3 * E:4 * E], preferred_element_type=jnp.float32) + bo
    # TODO(synk): dropout (p=0.1) on attn weights / residuals omitted (eval mode).
    # TODO(synk): optional attn_mask argument not supported (mask=None path only).

    # ---- residual + LayerNorm 1 ---------------------------------------------
    h = _layer_norm_rows(x + a, g1, be1)

    # ---- feed-forward: Linear(E->F) -> GELU -> Linear(F->E) -----------------
    f = jnp.dot(h, w_ref[:, 4 * E:4 * E + F], preferred_element_type=jnp.float32) + bf1
    f = _gelu_exact(f)
    f = jnp.dot(f, wf2_ref[...], preferred_element_type=jnp.float32) + bf2

    # ---- residual + LayerNorm 2 ---------------------------------------------
    y = _layer_norm_rows(h + f, g2, be2)

    out_ref[...] = y


# ---- one-time parameter packing (hoisted out of the forward path) -----------
def pack_params(params):
    """Pre-transpose and concatenate all weights/vectors once at load time."""
    E = params["ln1_weight"].shape[0]
    F = params["ff1_bias"].shape[0]

    w_slab = jnp.concatenate(
        [params["in_proj_weight"].T,     # (E, 3E)
         params["out_proj_weight"].T,    # (E, E)
         params["ff1_weight"].T],        # (E, F)
        axis=1).astype(jnp.float32)      # (E, 4E + F)
    wf2_t = params["ff2_weight"].T.astype(jnp.float32)   # (F, E)

    vec_width = ((max(3 * E, F, 128) + 127) // 128) * 128

    def row(v):
        v = v.astype(jnp.float32).reshape(-1)
        return jnp.pad(v, (0, vec_width - v.shape[0]))

    vec_slab = jnp.stack([
        row(params["in_proj_bias"]),     # 0: bqkv  (3E)
        row(params["out_proj_bias"]),    # 1: bo    (E)
        row(params["ln1_weight"]),       # 2: ln1 gamma
        row(params["ln1_bias"]),         # 3: ln1 beta
        row(params["ff1_bias"]),         # 4: bf1   (F)
        row(params["ff2_bias"]),         # 5: bf2   (E)
        row(params["ln2_weight"]),       # 6: ln2 gamma
        row(params["ln2_bias"]),         # 7: ln2 beta
    ])                                    # (8, vec_width) — one f32 tile

    return w_slab, wf2_t, vec_slab


# ---- forward wrapper ---------------------------------------------------------
def transformer_block_forward(x_sbe, packed):
    """x_sbe: [S, B, E] (PyTorch MultiheadAttention default layout)."""
    S, B, E = x_sbe.shape
    w_slab, wf2_t, vec_slab = packed
    N = S * B

    x2d = x_sbe.reshape(N, E).astype(jnp.float32)      # free contiguous reshape

    y = pl.pallas_call(
        functools.partial(transformer_block_kernel, batch=B),
        out_shape=jax.ShapeDtypeStruct((N, E), jnp.float32),
    )(x2d, w_slab, wf2_t, vec_slab)

    return y.reshape(S, B, E)                          # free contiguous reshape


# ---- pure-JAX reference (same math, exact erf GELU) --------------------------
def _layer_norm_ref(x, g, b):
    mu = jnp.mean(x, axis=-1, keepdims=True)
    var = jnp.mean((x - mu) ** 2, axis=-1, keepdims=True)
    return (x - mu) * jax.lax.rsqrt(var + LN_EPS) * g + b


def reference_forward(x_sbe, params):
    E = x_sbe.shape[-1]
    x = x_sbe                                          # [S, B, E]
    qkv = jnp.einsum("sbe,fe->sbf", x, params["in_proj_weight"]) + params["in_proj_bias"]
    q, k, v = qkv[..., :E], qkv[..., E:2 * E], qkv[..., 2 * E:]
    s = jnp.einsum("qbe,kbe->bqk", q, k) / math.sqrt(E)
    p = jax.nn.softmax(s, axis=-1)
    a = jnp.einsum("bqk,kbe->qbe", p, v)
    a = jnp.einsum("qbe,fe->qbf", a, params["out_proj_weight"]) + params["out_proj_bias"]
    h = _layer_norm_ref(x + a, params["ln1_weight"], params["ln1_bias"])
    f = jnp.einsum("sbe,fe->sbf", h, params["ff1_weight"]) + params["ff1_bias"]
    f = jax.nn.gelu(f, approximate=False)
    f = jnp.einsum("sbf,ef->sbe", f, params["ff2_weight"]) + params["ff2_bias"]
    return _layer_norm_ref(h + f, params["ln2_weight"], params["ln2_bias"])


if __name__ == "__main__":
    key = jax.random.PRNGKey(0)
    ks = jax.random.split(key, 13)
    E = EMBED

    def init(k, shape, s=0.1):
        return s * jax.random.normal(k, shape, jnp.float32)

    params = {
        "in_proj_weight": init(ks[0], (3 * E, E)),     # [3E, E] PyTorch layout
        "in_proj_bias": init(ks[1], (3 * E,)),
        "out_proj_weight": init(ks[2], (E, E)),
        "out_proj_bias": init(ks[3], (E,)),
        "ln1_weight": 1.0 + init(ks[4], (E,)),
        "ln1_bias": init(ks[5], (E,)),
        "ff1_weight": init(ks[6], (2 * E, E)),         # [2E, E]
        "ff1_bias": init(ks[7], (2 * E,)),
        "ff2_weight": init(ks[8], (E, 2 * E)),         # [E, 2E]
        "ff2_bias": init(ks[9], (E,)),
        "ln2_weight": 1.0 + init(ks[10], (E,)),
        "ln2_bias": init(ks[11], (E,)),
    }
    x = jax.random.normal(ks[12], (SEQ, BATCH, E), jnp.float32)

    packed = pack_params(params)                       # hoisted: once, not per call
    fwd = jax.jit(transformer_block_forward)

    out = fwd(x, packed)
    out = jax.block_until_ready(out)

    ref = reference_forward(x, params)
    assert out.shape == (SEQ, BATCH, EMBED)
    # tolerance accounts for the EUP approximate reciprocals (softmax denom, erf)
    max_err = float(jnp.max(jnp.abs(out - ref)))
    assert jnp.allclose(out, ref, atol=2e-3, rtol=2e-3), f"mismatch vs reference (max |err|={max_err})"

    print("KERNEL_OK")
</pallas_src>

<mosaic_0001>
module attributes {stable_mosaic.version = 11 : i64} {
  func.func @transformer_block_kernel(%arg0: memref<16x32xf32, #tpu.memory_space<vmem>>, %arg1: memref<32x192xf32, #tpu.memory_space<vmem>>, %arg2: memref<64x32xf32, #tpu.memory_space<vmem>>, %arg3: memref<8x128xf32, #tpu.memory_space<vmem>>, %arg4: memref<16x32xf32, #tpu.memory_space<vmem>>) attributes {dimension_semantics = [], scalar_prefetch = 0 : i64, scratch_operands = 0 : i64, tpu.core_type = #tpu.core_type<tc>} {
    %c0 = arith.constant 0 : index
    %c0_0 = arith.constant 0 : index
    %0 = vector.load %arg0[%c0, %c0_0] : memref<16x32xf32, #tpu.memory_space<vmem>>, vector<16x32xf32>
    %c0_1 = arith.constant 0 : index
    %c0_2 = arith.constant 0 : index
    %1 = vector.load %arg3[%c0_1, %c0_2] : memref<8x128xf32, #tpu.memory_space<vmem>>, vector<1x96xf32>
    %2 = vector.shape_cast %1 : vector<1x96xf32> to vector<96xf32>
    %c1 = arith.constant 1 : index
    %c0_3 = arith.constant 0 : index
    %3 = vector.load %arg3[%c1, %c0_3] : memref<8x128xf32, #tpu.memory_space<vmem>>, vector<1x32xf32>
    %4 = vector.shape_cast %3 : vector<1x32xf32> to vector<32xf32>
    %c2 = arith.constant 2 : index
    %c0_4 = arith.constant 0 : index
    %5 = vector.load %arg3[%c2, %c0_4] : memref<8x128xf32, #tpu.memory_space<vmem>>, vector<1x32xf32>
    %6 = vector.shape_cast %5 : vector<1x32xf32> to vector<32xf32>
    %c3 = arith.constant 3 : index
    %c0_5 = arith.constant 0 : index
    %7 = vector.load %arg3[%c3, %c0_5] : memref<8x128xf32, #tpu.memory_space<vmem>>, vector<1x32xf32>
    %8 = vector.shape_cast %7 : vector<1x32xf32> to vector<32xf32>
    %c4 = arith.constant 4 : index
    %c0_6 = arith.constant 0 : index
    %9 = vector.load %arg3[%c4, %c0_6] : memref<8x128xf32, #tpu.memory_space<vmem>>, vector<1x64xf32>
    %10 = vector.shape_cast %9 : vector<1x64xf32> to vector<64xf32>
    %c5 = arith.constant 5 : index
    %c0_7 = arith.constant 0 : index
    %11 = vector.load %arg3[%c5, %c0_7] : memref<8x128xf32, #tpu.memory_space<vmem>>, vector<1x32xf32>
    %12 = vector.shape_cast %11 : vector<1x32xf32> to vector<32xf32>
    %c6 = arith.constant 6 : index
    %c0_8 = arith.constant 0 : index
    %13 = vector.load %arg3[%c6, %c0_8] : memref<8x128xf32, #tpu.memory_space<vmem>>, vector<1x32xf32>
    %14 = vector.shape_cast %13 : vector<1x32xf32> to vector<32xf32>
    %c7 = arith.constant 7 : index
    %c0_9 = arith.constant 0 : index
    %15 = vector.load %arg3[%c7, %c0_9] : memref<8x128xf32, #tpu.memory_space<vmem>>, vector<1x32xf32>
    %16 = vector.shape_cast %15 : vector<1x32xf32> to vector<32xf32>
    %c0_10 = arith.constant 0 : index
    %c0_11 = arith.constant 0 : index
    %17 = vector.load %arg1[%c0_10, %c0_11] : memref<32x192xf32, #tpu.memory_space<vmem>>, vector<32x96xf32>
    %cst = arith.constant dense<0.000000e+00> : vector<16x96xf32>
    %18 = tpu.matmul %0, %17, %cst {dimension_numbers = #tpu.dot_dimension_numbers<[1], [0], [0], [1], [0, 0, 1, 1], [], []>} : vector<16x32xf32>, vector<32x96xf32>, vector<16x96xf32> -> vector<16x96xf32>
    %19 = vector.shape_cast %2 : vector<96xf32> to vector<1x96xf32>
    %20 = vector.broadcast %19 : vector<1x96xf32> to vector<16x96xf32>
    %21 = arith.addf %18, %20 : vector<16x96xf32>
    %22 = vector.extract_strided_slice %21 {offsets = [0, 0], sizes = [16, 32], strides = [1, 1]} : vector<16x96xf32> to vector<16x32xf32>
    %23 = vector.extract_strided_slice %21 {offsets = [0, 32], sizes = [16, 32], strides = [1, 1]} : vector<16x96xf32> to vector<16x32xf32>
    %24 = vector.extract_strided_slice %21 {offsets = [0, 64], sizes = [16, 32], strides = [1, 1]} : vector<16x96xf32> to vector<16x32xf32>
    %cst_12 = arith.constant dense<0.000000e+00> : vector<16x16xf32>
    %25 = tpu.matmul %22, %23, %cst_12 {dimension_numbers = #tpu.dot_dimension_numbers<[1], [1], [0], [0], [0, 0, 1, 0], [], []>} : vector<16x32xf32>, vector<16x32xf32>, vector<16x16xf32> -> vector<16x16xf32>
    %cst_13 = arith.constant 0.176776692 : f32
    %26 = vector.broadcast %cst_13 : f32 to vector<16x16xf32>
    %27 = arith.mulf %25, %26 : vector<16x16xf32>
    %28 = tpu.iota {dimensions = array<i32: 0>} : vector<16x16xi32>
    %29 = tpu.iota {dimensions = array<i32: 1>} : vector<16x16xi32>
    %c1_i32 = arith.constant 1 : i32
    %30 = vector.broadcast %c1_i32 : i32 to vector<16x16xi32>
    %31 = arith.andi %28, %30 : vector<16x16xi32>
    %c1_i32_14 = arith.constant 1 : i32
    %32 = vector.broadcast %c1_i32_14 : i32 to vector<16x16xi32>
    %33 = arith.andi %29, %32 : vector<16x16xi32>
    %34 = arith.cmpi eq, %31, %33 : vector<16x16xi32>
    %cst_15 = arith.constant 0xFF800000 : f32
    %35 = vector.broadcast %cst_15 : f32 to vector<16x16xf32>
    %36 = arith.select %34, %27, %35 : vector<16x16xi1>, vector<16x16xf32>
    %cst_16 = arith.constant dense<0xFF800000> : vector<16xf32>
    %37 = vector.multi_reduction <maximumf>, %36, %cst_16 [1] : vector<16x16xf32> to vector<16xf32>
    %38 = vector.shape_cast %37 : vector<16xf32> to vector<16x1xf32>
    %39 = vector.broadcast %38 : vector<16x1xf32> to vector<16x16xf32>
    %40 = arith.subf %36, %39 : vector<16x16xf32>
    %41 = math.exp %40 : vector<16x16xf32>
    %cst_17 = arith.constant dense<0.000000e+00> : vector<16xf32>
    %42 = vector.multi_reduction <add>, %41, %cst_17 [1] : vector<16x16xf32> to vector<16xf32>
    %43 = vector.shape_cast %42 : vector<16xf32> to vector<16x1xf32>
    %44 = tpu.reciprocal %43 {approx = true} : vector<16x1xf32> -> vector<16x1xf32>
    %45 = vector.broadcast %44 : vector<16x1xf32> to vector<16x16xf32>
    %46 = arith.mulf %41, %45 : vector<16x16xf32>
    %cst_18 = arith.constant dense<0.000000e+00> : vector<16x32xf32>
    %47 = tpu.matmul %46, %24, %cst_18 {dimension_numbers = #tpu.dot_dimension_numbers<[1], [0], [0], [1], [0, 0, 1, 1], [], []>} : vector<16x16xf32>, vector<16x32xf32>, vector<16x32xf32> -> vector<16x32xf32>
    %c0_19 = arith.constant 0 : index
    %c96 = arith.constant 96 : index
    %48 = vector.load %arg1[%c0_19, %c96] : memref<32x192xf32, #tpu.memory_space<vmem>>, vector<32x32xf32>
    %cst_20 = arith.constant dense<0.000000e+00> : vector<16x32xf32>
    %49 = tpu.matmul %47, %48, %cst_20 {dimension_numbers = #tpu.dot_dimension_numbers<[1], [0], [0], [1], [0, 0, 1, 1], [], []>} : vector<16x32xf32>, vector<32x32xf32>, vector<16x32xf32> -> vector<16x32xf32>
    %50 = vector.shape_cast %4 : vector<32xf32> to vector<1x32xf32>
    %51 = vector.broadcast %50 : vector<1x32xf32> to vector<16x32xf32>
    %52 = arith.addf %49, %51 : vector<16x32xf32>
    %53 = arith.addf %0, %52 : vector<16x32xf32>
    %cst_21 = arith.constant dense<0.000000e+00> : vector<16xf32>
    %54 = vector.multi_reduction <add>, %53, %cst_21 [1] : vector<16x32xf32> to vector<16xf32>
    %55 = vector.shape_cast %54 : vector<16xf32> to vector<16x1xf32>
    %cst_22 = arith.constant 3.200000e+01 : f32
    %56 = vector.broadcast %cst_22 : f32 to vector<16x1xf32>
    %57 = arith.divf %55, %56 : vector<16x1xf32>
    %58 = vector.broadcast %57 : vector<16x1xf32> to vector<16x32xf32>
    %59 = arith.subf %53, %58 : vector<16x32xf32>
    %60 = arith.mulf %59, %59 : vector<16x32xf32>
    %cst_23 = arith.constant dense<0.000000e+00> : vector<16xf32>
    %61 = vector.multi_reduction <add>, %60, %cst_23 [1] : vector<16x32xf32> to vector<16xf32>
    %62 = vector.shape_cast %61 : vector<16xf32> to vector<16x1xf32>
    %cst_24 = arith.constant 3.200000e+01 : f32
    %63 = vector.broadcast %cst_24 : f32 to vector<16x1xf32>
    %64 = arith.divf %62, %63 : vector<16x1xf32>
    %cst_25 = arith.constant 9.99999974E-6 : f32
    %65 = vector.broadcast %cst_25 : f32 to vector<16x1xf32>
    %66 = arith.addf %64, %65 : vector<16x1xf32>
    %67 = math.rsqrt %66 : vector<16x1xf32>
    %68 = vector.broadcast %67 : vector<16x1xf32> to vector<16x32xf32>
    %69 = arith.mulf %59, %68 : vector<16x32xf32>
    %70 = vector.shape_cast %6 : vector<32xf32> to vector<1x32xf32>
    %71 = vector.broadcast %70 : vector<1x32xf32> to vector<16x32xf32>
    %72 = arith.mulf %69, %71 : vector<16x32xf32>
    %73 = vector.shape_cast %8 : vector<32xf32> to vector<1x32xf32>
    %74 = vector.broadcast %73 : vector<1x32xf32> to vector<16x32xf32>
    %75 = arith.addf %72, %74 : vector<16x32xf32>
    %c0_26 = arith.constant 0 : index
    %c128 = arith.constant 128 : index
    %76 = vector.load %arg1[%c0_26, %c128] : memref<32x192xf32, #tpu.memory_space<vmem>>, vector<32x64xf32>
    %cst_27 = arith.constant dense<0.000000e+00> : vector<16x64xf32>
    %77 = tpu.matmul %75, %76, %cst_27 {dimension_numbers = #tpu.dot_dimension_numbers<[1], [0], [0], [1], [0, 0, 1, 1], [], []>} : vector<16x32xf32>, vector<32x64xf32>, vector<16x64xf32> -> vector<16x64xf32>
    %78 = vector.shape_cast %10 : vector<64xf32> to vector<1x64xf32>
    %79 = vector.broadcast %78 : vector<1x64xf32> to vector<16x64xf32>
    %80 = arith.addf %77, %79 : vector<16x64xf32>
    %cst_28 = arith.constant 5.000000e-01 : f32
    %81 = vector.broadcast %cst_28 : f32 to vector<16x64xf32>
    %82 = arith.mulf %81, %80 : vector<16x64xf32>
    %cst_29 = arith.constant 0.707106769 : f32
    %83 = vector.broadcast %cst_29 : f32 to vector<16x64xf32>
    %84 = arith.mulf %80, %83 : vector<16x64xf32>
    %85 = math.absf %84 : vector<16x64xf32>
    %cst_30 = arith.constant 0.327591091 : f32
    %86 = vector.broadcast %cst_30 : f32 to vector<16x64xf32>
    %87 = arith.mulf %86, %85 : vector<16x64xf32>
    %cst_31 = arith.constant 1.000000e+00 : f32
    %88 = vector.broadcast %cst_31 : f32 to vector<16x64xf32>
    %89 = arith.addf %88, %87 : vector<16x64xf32>
    %90 = tpu.reciprocal %89 {approx = true} : vector<16x64xf32> -> vector<16x64xf32>
    %cst_32 = arith.constant 1.06140542 : f32
    %91 = vector.broadcast %cst_32 : f32 to vector<16x64xf32>
    %92 = arith.mulf %90, %91 : vector<16x64xf32>
    %cst_33 = arith.constant -1.45315206 : f32
    %93 = vector.broadcast %cst_33 : f32 to vector<16x64xf32>
    %94 = arith.addf %93, %92 : vector<16x64xf32>
    %95 = arith.mulf %90, %94 : vector<16x64xf32>
    %cst_34 = arith.constant 1.42141378 : f32
    %96 = vector.broadcast %cst_34 : f32 to vector<16x64xf32>
    %97 = arith.addf %96, %95 : vector<16x64xf32>
    %98 = arith.mulf %90, %97 : vector<16x64xf32>
    %cst_35 = arith.constant -0.284496725 : f32
    %99 = vector.broadcast %cst_35 : f32 to vector<16x64xf32>
    %100 = arith.addf %99, %98 : vector<16x64xf32>
    %101 = arith.mulf %90, %100 : vector<16x64xf32>
    %cst_36 = arith.constant 0.254829586 : f32
    %102 = vector.broadcast %cst_36 : f32 to vector<16x64xf32>
    %103 = arith.addf %102, %101 : vector<16x64xf32>
    %104 = arith.mulf %90, %103 : vector<16x64xf32>
    %cst_37 = arith.constant 0.000000e+00 : f32
    %105 = vector.broadcast %cst_37 : f32 to vector<16x64xf32>
    %106 = arith.subf %105, %85 : vector<16x64xf32>
    %107 = arith.mulf %106, %85 : vector<16x64xf32>
    %108 = math.exp %107 : vector<16x64xf32>
    %109 = arith.mulf %104, %108 : vector<16x64xf32>
    %cst_38 = arith.constant 1.000000e+00 : f32
    %110 = vector.broadcast %cst_38 : f32 to vector<16x64xf32>
    %111 = arith.subf %110, %109 : vector<16x64xf32>
    %cst_39 = arith.constant 0.000000e+00 : f32
    %112 = vector.broadcast %cst_39 : f32 to vector<16x64xf32>
    %113 = arith.cmpf oge, %84, %112 : vector<16x64xf32>
    %cst_40 = arith.constant 0.000000e+00 : f32
    %114 = vector.broadcast %cst_40 : f32 to vector<16x64xf32>
    %115 = arith.subf %114, %111 : vector<16x64xf32>
    %116 = arith.select %113, %111, %115 : vector<16x64xi1>, vector<16x64xf32>
    %cst_41 = arith.constant 1.000000e+00 : f32
    %117 = vector.broadcast %cst_41 : f32 to vector<16x64xf32>
    %118 = arith.addf %117, %116 : vector<16x64xf32>
    %119 = arith.mulf %82, %118 : vector<16x64xf32>
    %c0_42 = arith.constant 0 : index
    %c0_43 = arith.constant 0 : index
    %120 = vector.load %arg2[%c0_42, %c0_43] : memref<64x32xf32, #tpu.memory_space<vmem>>, vector<64x32xf32>
    %cst_44 = arith.constant dense<0.000000e+00> : vector<16x32xf32>
    %121 = tpu.matmul %119, %120, %cst_44 {dimension_numbers = #tpu.dot_dimension_numbers<[1], [0], [0], [1], [0, 0, 1, 1], [], []>} : vector<16x64xf32>, vector<64x32xf32>, vector<16x32xf32> -> vector<16x32xf32>
    %122 = vector.shape_cast %12 : vector<32xf32> to vector<1x32xf32>
    %123 = vector.broadcast %122 : vector<1x32xf32> to vector<16x32xf32>
    %124 = arith.addf %121, %123 : vector<16x32xf32>
    %125 = arith.addf %75, %124 : vector<16x32xf32>
    %cst_45 = arith.constant dense<0.000000e+00> : vector<16xf32>
    %126 = vector.multi_reduction <add>, %125, %cst_45 [1] : vector<16x32xf32> to vector<16xf32>
    %127 = vector.shape_cast %126 : vector<16xf32> to vector<16x1xf32>
    %cst_46 = arith.constant 3.200000e+01 : f32
    %128 = vector.broadcast %cst_46 : f32 to vector<16x1xf32>
    %129 = arith.divf %127, %128 : vector<16x1xf32>
    %130 = vector.broadcast %129 : vector<16x1xf32> to vector<16x32xf32>
    %131 = arith.subf %125, %130 : vector<16x32xf32>
    %132 = arith.mulf %131, %131 : vector<16x32xf32>
    %cst_47 = arith.constant dense<0.000000e+00> : vector<16xf32>
    %133 = vector.multi_reduction <add>, %132, %cst_47 [1] : vector<16x32xf32> to vector<16xf32>
    %134 = vector.shape_cast %133 : vector<16xf32> to vector<16x1xf32>
    %cst_48 = arith.constant 3.200000e+01 : f32
    %135 = vector.broadcast %cst_48 : f32 to vector<16x1xf32>
    %136 = arith.divf %134, %135 : vector<16x1xf32>
    %cst_49 = arith.constant 9.99999974E-6 : f32
    %137 = vector.broadcast %cst_49 : f32 to vector<16x1xf32>
    %138 = arith.addf %136, %137 : vector<16x1xf32>
    %139 = math.rsqrt %138 : vector<16x1xf32>
    %140 = vector.broadcast %139 : vector<16x1xf32> to vector<16x32xf32>
    %141 = arith.mulf %131, %140 : vector<16x32xf32>
    %142 = vector.shape_cast %14 : vector<32xf32> to vector<1x32xf32>
    %143 = vector.broadcast %142 : vector<1x32xf32> to vector<16x32xf32>
    %144 = arith.mulf %141, %143 : vector<16x32xf32>
    %145 = vector.shape_cast %16 : vector<32xf32> to vector<1x32xf32>
    %146 = vector.broadcast %145 : vector<1x32xf32> to vector<16x32xf32>
    %147 = arith.addf %144, %146 : vector<16x32xf32>
    %c0_50 = arith.constant 0 : index
    %c0_51 = arith.constant 0 : index
    %148 = vector.load %arg4[%c0_50, %c0_51] : memref<16x32xf32, #tpu.memory_space<vmem>>, vector<16x32xf32>
    tpu.vector_store %arg4[%c0_50, %c0_51], %147 {strides = array<i32>} : memref<16x32xf32, #tpu.memory_space<vmem>>, vector<16x32xf32>,
    return
  }
}

</mosaic_0001>

<llo_original>
// kernel: transformer_block_forward.1
$region0: #{transformer_block_forward.1}
  #allocation0 [shape = 'u32[]', space=smem, size = 0x4, offset = 0x4, fixed_abs, tag = 'smem constant byte address 0x4 - core index']
  #allocation1 [shape = 'u32[144,128]{1,0:T(1,128)}', space=vmem, size = 0x12000, scoped, tag = 'internal scratch']
  %s0 = inlined_call_operand.vmem [shape: f32[16,32], index: 0, kind: input, shape index: {}]
  %s1 = inlined_call_operand.vmem [shape: f32[32,192], index: 1, kind: input, shape index: {}]
  %s2 = inlined_call_operand.vmem [shape: f32[64,32], index: 2, kind: input, shape index: {}]
  %s3 = inlined_call_operand.vmem [shape: f32[8,128], index: 3, kind: input, shape index: {}]
  %s4 = inlined_call_operand.hbm [shape: f32[16,32], index: 4, kind: output, shape index: {}]
  %s5 = sld [smem:[#allocation0]]
  $region26: #{transformer_block_forward.1} parent=0
    _
  %s7 = ssub.s32 1, %s5
  %s8 = scalar_select 0, %s7, %s5
  $region1: #{transformer_block_forward.1} parent=0
    #allocation2 [shape = 'u8[8192]{0}', space=vmem, size = 0x2000, scoped, tag = 'output window, operand 0, single buffered']
    #allocation3 [shape = 's32[1]{0}', space=sflag, size = 0x4, scoped, tag = 'scoped memory for transformer_block_forward.1']
    %9 = vsyncpa [#allocation3], 0
    // Predicated region
    $region2: #{transformer_block_forward.1} parent=1 // pred_check
      _
    $region3: #{transformer_block_forward.1} parent=1 // pred_check_branch
      %11 = sbr.rel (0) target = $region5
    $region4: #{transformer_block_forward.1} parent=1 // pred_region
      _
    $region5: #{transformer_block_forward.1} parent=1 // pred_fallthru
      _
    // Predicated region
    $region6: #{transformer_block_forward.1} parent=1 // pred_check
      _
    $region7: #{transformer_block_forward.1} parent=1 // pred_check_branch
      %13 = sbr.rel (0) target = $region9
    $region8: #{transformer_block_forward.1} parent=1 // pred_region
      _
    $region9: #{transformer_block_forward.1} parent=1 // pred_fallthru
      _
    // Predicated region
    $region10: #{transformer_block_forward.1} parent=1 // pred_check
      _
    $region11: #{transformer_block_forward.1} parent=1 // pred_check_branch
      %15 = sbr.rel (0) target = $region13
    $region12: #{transformer_block_forward.1} parent=1 // pred_region
      _
    $region13: #{transformer_block_forward.1} parent=1 // pred_fallthru
      _
    // Predicated region
    $region14: #{transformer_block_forward.1} parent=1 // pred_check
      _
    $region15: #{transformer_block_forward.1} parent=1 // pred_check_branch
      %17 = sbr.rel (0) target = $region17
    $region16: #{transformer_block_forward.1} parent=1 // pred_region
      _
    $region17: #{transformer_block_forward.1} parent=1 // pred_fallthru
      _
    %v18 = vld [vmem:[%s0] sm:$0xff]
    %v19 = vld [vmem:[%s0 + $0x8] sm:$0xff]
    %v20 = vld [vmem:[%s3] sm:$0x1]
    %v21 = vld [vmem:[%s3 + $0x1] sm:$0x1]
    %v22 = vld [vmem:[%s3 + $0x2] sm:$0x1]
    %v23 = vld [vmem:[%s3 + $0x3] sm:$0x1]
    %v24 = vld [vmem:[%s3 + $0x4] sm:$0x1]
    %v25 = vld [vmem:[%s3 + $0x5] sm:$0x1]
    %v26 = vld [vmem:[%s3 + $0x6] sm:$0x1]
    %v27 = vld [vmem:[%s3 + $0x7] sm:$0x1]
    %v28 = vld [vmem:[%s1] sm:$0xff]
    %v29 = vld [vmem:[%s1 + $0x10] sm:$0xff]
    %v30 = vld [vmem:[%s1 + $0x20] sm:$0xff]
    %v31 = vld [vmem:[%s1 + $0x30] sm:$0xff]
    %v32 = vlaneseq
    %v33 = vshrl.u32 %v32, 7
    %v34 = vsub.s32 0, %v33
    %v35 = vrot.slane %v20, %v34
    %vm36 = vcmask 261120
    %v38 = vsel %vm36, %v18, 0
    %v41 = vsel %vm36, %v19, 0
    %43 = vmatprep.subr.mxu0 0.0
    %44 = vmatpush1.msra.mxu0 0.0
    %45 = vmatprep.subr.mxu0 0.0
    %46 = vmatpush1.msra.mxu0 0.0
    %47 = vmatprep.subr.mxu0 0.0
    %48 = vmatpush1.msra.mxu0 0.0
    %49 = vmatprep.subr.mxu0 0.0
    %50 = vmatpush1.msra.mxu0 0.0
    %51 = vmatprep.subr.mxu0 0.0
    %52 = vmatpush1.msra.mxu0 0.0
    %53 = vmatprep.subr.mxu0 0.0
    %54 = vmatpush1.msra.mxu0 0.0
    %55 = vmatprep.subr.mxu0 0.0
    %56 = vmatpush1.msra.mxu0 0.0
    %57 = vmatprep.subr.mxu0 0.0
    %58 = vmatpush1.msra.mxu0 0.0
    %59 = vmatprep.subr.mxu0 0.0
    %60 = vmatpush1.msra.mxu0 0.0
    %61 = vmatprep.subr.mxu0 0.0
    %62 = vmatpush1.msra.mxu0 0.0
    %63 = vmatprep.subr.mxu0 0.0
    %64 = vmatpush1.msra.mxu0 0.0
    %65 = vmatprep.subr.mxu0 0.0
    %66 = vmatpush1.msra.mxu0 0.0
    %67 = vmatprep.subr.mxu0 0.0
    %68 = vmatpush1.msra.mxu0 %v31
    %69 = vmatprep.subr.mxu0 0.0
    %70 = vmatpush1.msra.mxu0 %v30
    %71 = vmatprep.subr.mxu0 0.0
    %72 = vmatpush1.msra.mxu0 %v29
    %73 = vmatprep.subr.mxu0 0.0
    %74 = vmatpush1.msra.mxu0 %v28
    %75 = vmatprep.subr.mxu0 0.0
    %76 = vmatpush2.msra.mxu0 0.0
    %77 = vmatprep.subr.mxu0 0.0
    %78 = vmatpush2.msra.mxu0 0.0
    %79 = vmatprep.subr.mxu0 0.0
    %80 = vmatpush2.msra.mxu0 0.0
    %81 = vmatprep.subr.mxu0 0.0
    %82 = vmatpush2.msra.mxu0 0.0
    %83 = vmatprep.subr.mxu0 0.0
    %84 = vmatpush2.msra.mxu0 0.0
    %85 = vmatprep.subr.mxu0 0.0
    %86 = vmatpush2.msra.mxu0 0.0
    %87 = vmatprep.subr.mxu0 0.0
    %88 = vmatpush2.msra.mxu0 0.0
    %89 = vmatprep.subr.mxu0 0.0
    %90 = vmatpush2.msra.mxu0 0.0
    %91 = vmatprep.subr.mxu0 0.0
    %92 = vmatpush2.msra.mxu0 0.0
    %93 = vmatprep.subr.mxu0 0.0
    %94 = vmatpush2.msra.mxu0 0.0
    %95 = vmatprep.subr.mxu0 0.0
    %96 = vmatpush2.msra.mxu0 0.0
    %97 = vmatprep.subr.mxu0 0.0
    %98 = vmatpush2.msra.mxu0 0.0
    %99 = vmatprep.subr.mxu0 0.0
    %100 = vmatpush2.msra.mxu0 0.0
    %101 = vmatprep.subr.mxu0 0.0
    %102 = vmatpush2.msra.mxu0 0.0
    %103 = vmatprep.subr.mxu0 0.0
    %104 = vmatpush2.msra.mxu0 0.0
    %105 = vmatprep.subr.mxu0 0.0
    %106 = vmatpush2.msra.mxu0 0.0
    %107 = vmatprep.mubr.f32.mxu0 0.0
    %108 = vmatmul.mubr.f32.gmra.mxu0 %v38
    %v109 = vpop.f32.mrf.mxu0
    %v110 = vadd.f32 %v35, %v109
    %v111 = vpop.f32.mrf.mxu0
    %112 = vmatprep.mubr.f32.mxu0 0.0
    %113 = vmatmul.mubr.f32.gmra.mxu0 %v41
    %v114 = vpop.f32.mrf.mxu0
    %v115 = vadd.f32 %v35, %v114
    %v116 = vpop.f32.mrf.mxu0
    %117 = vdwg.mxu0
    %120 = vrot.lane.b32.xlu0 %v110, 96
    %v121 = vpop.permute.xlu0 %120
    %122 = vrot.lane.b32.xlu0 %v115, 96
    %v123 = vpop.permute.xlu0 %122
    %v124 = vsel %vm36, %v110, 0
    %v126 = vsel %vm36, %v115, 0
    %v128 = vsel %vm36, %v121, 0
    %v130 = vsel %vm36, %v123, 0
    %132 = vmatprep.subr.mxu0 0.0
    %133 = vmatpush1.xpose.msra.mxu0 0.0
    %134 = vmatprep.subr.mxu0 0.0
    %135 = vmatpush1.xpose.msra.mxu0 0.0
    %136 = vmatprep.subr.mxu0 0.0
    %137 = vmatpush1.xpose.msra.mxu0 0.0
    %138 = vmatprep.subr.mxu0 0.0
    %139 = vmatpush1.xpose.msra.mxu0 0.0
    %140 = vmatprep.subr.mxu0 0.0
    %141 = vmatpush1.xpose.msra.mxu0 0.0
    %142 = vmatprep.subr.mxu0 0.0
    %143 = vmatpush1.xpose.msra.mxu0 0.0
    %144 = vmatprep.subr.mxu0 0.0
    %145 = vmatpush1.xpose.msra.mxu0 0.0
    %146 = vmatprep.subr.mxu0 0.0
    %147 = vmatpush1.xpose.msra.mxu0 0.0
    %148 = vmatprep.subr.mxu0 0.0
    %149 = vmatpush1.xpose.msra.mxu0 0.0
    %150 = vmatprep.subr.mxu0 0.0
    %151 = vmatpush1.xpose.msra.mxu0 0.0
    %152 = vmatprep.subr.mxu0 0.0
    %153 = vmatpush1.xpose.msra.mxu0 0.0
    %154 = vmatprep.subr.mxu0 0.0
    %155 = vmatpush1.xpose.msra.mxu0 0.0
    %156 = vmatprep.subr.mxu0 0.0
    %157 = vmatpush1.xpose.msra.mxu0 0.0
    %158 = vmatprep.subr.mxu0 0.0
    %159 = vmatpush1.xpose.msra.mxu0 0.0
    %160 = vmatprep.subr.mxu0 0.0
    %161 = vmatpush1.xpose.msra.mxu0 %v130
    %162 = vmatprep.subr.mxu0 0.0
    %163 = vmatpush1.xpose.msra.mxu0 %v128
    %164 = vmatprep.subr.mxu0 0.0
    %165 = vmatpush2.xpose.msra.mxu0 0.0
    %166 = vmatprep.subr.mxu0 0.0
    %167 = vmatpush2.xpose.msra.mxu0 0.0
    %168 = vmatprep.subr.mxu0 0.0
    %169 = vmatpush2.xpose.msra.mxu0 0.0
    %170 = vmatprep.subr.mxu0 0.0
    %171 = vmatpush2.xpose.msra.mxu0 0.0
    %172 = vmatprep.subr.mxu0 0.0
    %173 = vmatpush2.xpose.msra.mxu0 0.0
    %174 = vmatprep.subr.mxu0 0.0
    %175 = vmatpush2.xpose.msra.mxu0 0.0
    %176 = vmatprep.subr.mxu0 0.0
    %177 = vmatpush2.xpose.msra.mxu0 0.0
    %178 = vmatprep.subr.mxu0 0.0
    %179 = vmatpush2.xpose.msra.mxu0 0.0
    %180 = vmatprep.subr.mxu0 0.0
    %181 = vmatpush2.xpose.msra.mxu0 0.0
    %182 = vmatprep.subr.mxu0 0.0
    %183 = vmatpush2.xpose.msra.mxu0 0.0
    %184 = vmatprep.subr.mxu0 0.0
    %185 = vmatpush2.xpose.msra.mxu0 0.0
    %186 = vmatprep.subr.mxu0 0.0
    %187 = vmatpush2.xpose.msra.mxu0 0.0
    %188 = vmatprep.subr.mxu0 0.0
    %189 = vmatpush2.xpose.msra.mxu0 0.0
    %190 = vmatprep.subr.mxu0 0.0
    %191 = vmatpush2.xpose.msra.mxu0 0.0
    %192 = vmatprep.subr.mxu0 0.0
    %193 = vmatpush2.xpose.msra.mxu0 0.0
    %194 = vmatprep.subr.mxu0 0.0
    %195 = vmatpush2.xpose.msra.mxu0 0.0
    %196 = vmatprep.mubr.f32.mxu0 0.0
    %197 = vmatmul.mubr.f32.gmra.mxu0 %v124
    %v198 = vpop.f32.mrf.mxu0
    %v199 = vadd.f32 0.0, %v198
    %v200 = vpop.f32.mrf.mxu0
    %201 = vmatprep.mubr.f32.mxu0 0.0
    %202 = vmatmul.mubr.f32.gmra.mxu0 %v126
    %v203 = vpop.f32.mrf.mxu0
    %v204 = vadd.f32 0.0, %v203
    %v205 = vpop.f32.mrf.mxu0
    %206 = vdwg.mxu0
    %v207 = vmul.f32 %v199, 0.17677669
    %v208 = vmul.f32 %v204, 0.17677669
    %v209 = vlaneseq
    %v210 = vshrl.u32 %v209, 7
    %v211 = vadd.s32 %v210, 8
    %v212 = vlaneseq
    %v213 = vand.u32 %v212, 127
    %v214 = vand.u32 %v210, 1
    %v215 = vand.u32 %v211, 1
    %v216 = vand.u32 %v213, 1
    %vm217 = vcmp.eq.s32.totalorder %v214, %v216
    %vm218 = vcmp.eq.s32.totalorder %v215, %v216
    %v219 = vsel %vm217, %v207, -inf
    %v220 = vsel %vm218, %v208, -inf
    %vm221 = vcmask 130048
    %v222 = vsel %vm221, %v219, -inf
    %223 = vmax.xlane.f32.xlu0 %v222
    %v224 = vpop.xlane.xlu0 %223
    %v225 = vsel %vm221, %v220, -inf
    %226 = vmax.xlane.f32.xlu0 %v225
    %v227 = vpop.xlane.xlu0 %226
    %v228 = vsub.f32 %v219, %v224
    %v229 = vsub.f32 %v220, %v227
    %v230 = vmul.f32 %v228, 1.442695
    %v231 = vpow.pop %v230
    %v232 = vmul.f32 %v229, 1.442695
    %v233 = vpow.pop %v232
    %v234 = vsel %vm221, %v231, 0.0
    %235 = vadd.xlane.f32.xlu0 %v234
    %v236 = vpop.xlane.xlu0 %235
    %v237 = vsel %vm221, %v233, 0.0
    %238 = vadd.xlane.f32.xlu0 %v237
    %v239 = vpop.xlane.xlu0 %238
    %v240 = vrcp.pop %v236
    %v241 = vrcp.pop %v239
    %v242 = vmul.f32 %v231, %v240
    %v243 = vmul.f32 %v233, %v241
    %244 = vrot.lane.b32.xlu0 %v110, 64
    %v245 = vpop.permute.xlu0 %244
    %246 = vrot.lane.b32.xlu0 %v115, 64
    %v247 = vpop.permute.xlu0 %246
    %v251 = vsel %vm221, %v242, 0
    %v254 = vsel %vm221, %v243, 0
    %256 = vmatprep.subr.mxu0 0.0
    %257 = vmatpush1.msra.mxu0 0.0
    %258 = vmatprep.subr.mxu0 0.0
    %259 = vmatpush1.msra.mxu0 0.0
    %260 = vmatprep.subr.mxu0 0.0
    %261 = vmatpush1.msra.mxu0 0.0
    %262 = vmatprep.subr.mxu0 0.0
    %263 = vmatpush1.msra.mxu0 0.0
    %264 = vmatprep.subr.mxu0 0.0
    %265 = vmatpush1.msra.mxu0 0.0
    %266 = vmatprep.subr.mxu0 0.0
    %267 = vmatpush1.msra.mxu0 0.0
    %268 = vmatprep.subr.mxu0 0.0
    %269 = vmatpush1.msra.mxu0 0.0
    %270 = vmatprep.subr.mxu0 0.0
    %271 = vmatpush1.msra.mxu0 0.0
    %272 = vmatprep.subr.mxu0 0.0
    %273 = vmatpush1.msra.mxu0 0.0
    %274 = vmatprep.subr.mxu0 0.0
    %275 = vmatpush1.msra.mxu0 0.0
    %276 = vmatprep.subr.mxu0 0.0
    %277 = vmatpush1.msra.mxu0 0.0
    %278 = vmatprep.subr.mxu0 0.0
    %279 = vmatpush1.msra.mxu0 0.0
    %280 = vmatprep.subr.mxu0 0.0
    %281 = vmatpush1.msra.mxu0 0.0
    %282 = vmatprep.subr.mxu0 0.0
    %283 = vmatpush1.msra.mxu0 0.0
    %284 = vmatprep.subr.mxu0 0.0
    %285 = vmatpush1.msra.mxu0 %v247
    %286 = vmatprep.subr.mxu0 0.0
    %287 = vmatpush1.msra.mxu0 %v245
    %288 = vmatprep.subr.mxu0 0.0
    %289 = vmatpush2.msra.mxu0 0.0
    %290 = vmatprep.subr.mxu0 0.0
    %291 = vmatpush2.msra.mxu0 0.0
    %292 = vmatprep.subr.mxu0 0.0
    %293 = vmatpush2.msra.mxu0 0.0
    %294 = vmatprep.subr.mxu0 0.0
    %295 = vmatpush2.msra.mxu0 0.0
    %296 = vmatprep.subr.mxu0 0.0
    %297 = vmatpush2.msra.mxu0 0.0
    %298 = vmatprep.subr.mxu0 0.0
    %299 = vmatpush2.msra.mxu0 0.0
    %300 = vmatprep.subr.mxu0 0.0
    %301 = vmatpush2.msra.mxu0 0.0
    %302 = vmatprep.subr.mxu0 0.0
    %303 = vmatpush2.msra.mxu0 0.0
    %304 = vmatprep.subr.mxu0 0.0
    %305 = vmatpush2.msra.mxu0 0.0
    %306 = vmatprep.subr.mxu0 0.0
    %307 = vmatpush2.msra.mxu0 0.0
    %308 = vmatprep.subr.mxu0 0.0
    %309 = vmatpush2.msra.mxu0 0.0
    %310 = vmatprep.subr.mxu0 0.0
    %311 = vmatpush2.msra.mxu0 0.0
    %312 = vmatprep.subr.mxu0 0.0
    %313 = vmatpush2.msra.mxu0 0.0
    %314 = vmatprep.subr.mxu0 0.0
    %315 = vmatpush2.msra.mxu0 0.0
    %316 = vmatprep.subr.mxu0 0.0
    %317 = vmatpush2.msra.mxu0 0.0
    %318 = vmatprep.subr.mxu0 0.0
    %319 = vmatpush2.msra.mxu0 0.0
    %320 = vmatprep.mubr.f32.mxu0 0.0
    %321 = vmatmul.mubr.f32.gmra.mxu0 %v251
    %v322 = vpop.f32.mrf.mxu0
    %v323 = vadd.f32 0.0, %v322
    %v324 = vpop.f32.mrf.mxu0
    %325 = vmatprep.mubr.f32.mxu0 0.0
    %326 = vmatmul.mubr.f32.gmra.mxu0 %v254
    %v327 = vpop.f32.mrf.mxu0
    %v328 = vadd.f32 0.0, %v327
    %v329 = vpop.f32.mrf.mxu0
    %330 = vdwg.mxu0
    %v331 = vlaneseq
    %v332 = vshrl.u32 %v331, 7
    %v333 = vsub.s32 0, %v332
    %v334 = vrot.slane %v21, %v333
    %339 = vrot.lane.b32.xlu0 %v28, 32
    %v340 = vpop.permute.xlu0 %339
    %341 = vrot.lane.b32.xlu0 %v29, 32
    %v342 = vpop.permute.xlu0 %341
    %343 = vrot.lane.b32.xlu0 %v30, 32
    %v344 = vpop.permute.xlu0 %343
    %345 = vrot.lane.b32.xlu0 %v31, 32
    %v346 = vpop.permute.xlu0 %345
    %v352 = vsel %vm36, %v323, 0
    %v355 = vsel %vm36, %v328, 0
    %357 = vmatprep.subr.mxu0 0.0
    %358 = vmatpush1.msra.mxu0 0.0
    %359 = vmatprep.subr.mxu0 0.0
    %360 = vmatpush1.msra.mxu0 0.0
    %361 = vmatprep.subr.mxu0 0.0
    %362 = vmatpush1.msra.mxu0 0.0
    %363 = vmatprep.subr.mxu0 0.0
    %364 = vmatpush1.msra.mxu0 0.0
    %365 = vmatprep.subr.mxu0 0.0
    %366 = vmatpush1.msra.mxu0 0.0
    %367 = vmatprep.subr.mxu0 0.0
    %368 = vmatpush1.msra.mxu0 0.0
    %369 = vmatprep.subr.mxu0 0.0
    %370 = vmatpush1.msra.mxu0 0.0
    %371 = vmatprep.subr.mxu0 0.0
    %372 = vmatpush1.msra.mxu0 0.0
    %373 = vmatprep.subr.mxu0 0.0
    %374 = vmatpush1.msra.mxu0 0.0
    %375 = vmatprep.subr.mxu0 0.0
    %376 = vmatpush1.msra.mxu0 0.0
    %377 = vmatprep.subr.mxu0 0.0
    %378 = vmatpush1.msra.mxu0 0.0
    %379 = vmatprep.subr.mxu0 0.0
    %380 = vmatpush1.msra.mxu0 0.0
    %381 = vmatprep.subr.mxu0 0.0
    %382 = vmatpush1.msra.mxu0 %v346
    %383 = vmatprep.subr.mxu0 0.0
    %384 = vmatpush1.msra.mxu0 %v344
    %385 = vmatprep.subr.mxu0 0.0
    %386 = vmatpush1.msra.mxu0 %v342
    %387 = vmatprep.subr.mxu0 0.0
    %388 = vmatpush1.msra.mxu0 %v340
    %389 = vmatprep.subr.mxu0 0.0
    %390 = vmatpush2.msra.mxu0 0.0
    %391 = vmatprep.subr.mxu0 0.0
    %392 = vmatpush2.msra.mxu0 0.0
    %393 = vmatprep.subr.mxu0 0.0
    %394 = vmatpush2.msra.mxu0 0.0
    %395 = vmatprep.subr.mxu0 0.0
    %396 = vmatpush2.msra.mxu0 0.0
    %397 = vmatprep.subr.mxu0 0.0
    %398 = vmatpush2.msra.mxu0 0.0
    %399 = vmatprep.subr.mxu0 0.0
    %400 = vmatpush2.msra.mxu0 0.0
    %401 = vmatprep.subr.mxu0 0.0
    %402 = vmatpush2.msra.mxu0 0.0
    %403 = vmatprep.subr.mxu0 0.0
    %404 = vmatpush2.msra.mxu0 0.0
    %405 = vmatprep.subr.mxu0 0.0
    %406 = vmatpush2.msra.mxu0 0.0
    %407 = vmatprep.subr.mxu0 0.0
    %408 = vmatpush2.msra.mxu0 0.0
    %409 = vmatprep.subr.mxu0 0.0
    %410 = vmatpush2.msra.mxu0 0.0
    %411 = vmatprep.subr.mxu0 0.0
    %412 = vmatpush2.msra.mxu0 0.0
    %413 = vmatprep.subr.mxu0 0.0
    %414 = vmatpush2.msra.mxu0 0.0
    %415 = vmatprep.subr.mxu0 0.0
    %416 = vmatpush2.msra.mxu0 0.0
    %417 = vmatprep.subr.mxu0 0.0
    %418 = vmatpush2.msra.mxu0 0.0
    %419 = vmatprep.subr.mxu0 0.0
    %420 = vmatpush2.msra.mxu0 0.0
    %421 = vmatprep.mubr.f32.mxu0 0.0
    %422 = vmatmul.mubr.f32.gmra.mxu0 %v352
    %v423 = vpop.f32.mrf.mxu0
    %v424 = vadd.f32 %v334, %v423
    %v425 = vpop.f32.mrf.mxu0
    %426 = vmatprep.mubr.f32.mxu0 0.0
    %427 = vmatmul.mubr.f32.gmra.mxu0 %v355
    %v428 = vpop.f32.mrf.mxu0
    %v429 = vadd.f32 %v334, %v428
    %v430 = vpop.f32.mrf.mxu0
    %431 = vdwg.mxu0
    %v432 = vadd.f32 %v18, %v424
    %v433 = vadd.f32 %v19, %v429
    %v434 = vsel %vm36, %v432, 0.0
    %435 = vadd.xlane.f32.xlu0 %v434
    %v436 = vpop.xlane.xlu0 %435
    %v437 = vsel %vm36, %v433, 0.0
    %438 = vadd.xlane.f32.xlu0 %v437
    %v439 = vpop.xlane.xlu0 %438
    %v440 = vrcp.pop 32.0
    %v441 = vmul.f32 %v436, %v440
    %v442 = vmul.f32 %v439, %v440
    %v443 = vsub.f32 %v432, %v441
    %v444 = vsub.f32 %v433, %v442
    %v445 = vmul.f32 %v443, %v443
    %v446 = vmul.f32 %v444, %v444
    %v447 = vsel %vm36, %v445, 0.0
    %448 = vadd.xlane.f32.xlu0 %v447
    %v449 = vpop.xlane.xlu0 %448
    %v450 = vsel %vm36, %v446, 0.0
    %451 = vadd.xlane.f32.xlu0 %v450
    %v452 = vpop.xlane.xlu0 %451
    %v453 = vmul.f32 %v449, %v440
    %v454 = vmul.f32 %v452, %v440
    %v455 = vadd.f32 %v453, 1e-05
    %v456 = vadd.f32 %v454, 1e-05
    %v457 = vrsqrt.pop %v455
    %v458 = vrsqrt.pop %v456
    %v459 = vmul.f32 %v443, %v457
    %v460 = vmul.f32 %v444, %v458
    %v461 = vlaneseq
    %v462 = vshrl.u32 %v461, 7
    %v463 = vsub.s32 0, %v462
    %v464 = vrot.slane %v22, %v463
    %v465 = vmul.f32 %v459, %v464
    %v466 = vmul.f32 %v460, %v464
    %v467 = vlaneseq
    %v468 = vshrl.u32 %v467, 7
    %v469 = vsub.s32 0, %v468
    %v470 = vrot.slane %v23, %v469
    %v471 = vadd.f32 %v465, %v470
    %v472 = vadd.f32 %v466, %v470
    %v473 = vld [vmem:[%s1 + $0x8] sm:$0xff]
    %v474 = vld [vmem:[%s1 + $0x18] sm:$0xff]
    %v475 = vld [vmem:[%s1 + $0x28] sm:$0xff]
    %v476 = vld [vmem:[%s1 + $0x38] sm:$0xff]
    %v477 = vlaneseq
    %v478 = vshrl.u32 %v477, 7
    %v479 = vsub.s32 0, %v478
    %v480 = vrot.slane %v24, %v479
    %v482 = vsel %vm36, %v471, 0
    %v485 = vsel %vm36, %v472, 0
    %487 = vmatprep.subr.mxu0 0.0
    %488 = vmatpush1.msra.mxu0 0.0
    %489 = vmatprep.subr.mxu0 0.0
    %490 = vmatpush1.msra.mxu0 0.0
    %491 = vmatprep.subr.mxu0 0.0
    %492 = vmatpush1.msra.mxu0 0.0
    %493 = vmatprep.subr.mxu0 0.0
    %494 = vmatpush1.msra.mxu0 0.0
    %495 = vmatprep.subr.mxu0 0.0
    %496 = vmatpush1.msra.mxu0 0.0
    %497 = vmatprep.subr.mxu0 0.0
    %498 = vmatpush1.msra.mxu0 0.0
    %499 = vmatprep.subr.mxu0 0.0
    %500 = vmatpush1.msra.mxu0 0.0
    %501 = vmatprep.subr.mxu0 0.0
    %502 = vmatpush1.msra.mxu0 0.0
    %503 = vmatprep.subr.mxu0 0.0
    %504 = vmatpush1.msra.mxu0 0.0
    %505 = vmatprep.subr.mxu0 0.0
    %506 = vmatpush1.msra.mxu0 0.0
    %507 = vmatprep.subr.mxu0 0.0
    %508 = vmatpush1.msra.mxu0 0.0
    %509 = vmatprep.subr.mxu0 0.0
    %510 = vmatpush1.msra.mxu0 0.0
    %511 = vmatprep.subr.mxu0 0.0
    %512 = vmatpush1.msra.mxu0 %v476
    %513 = vmatprep.subr.mxu0 0.0
    %514 = vmatpush1.msra.mxu0 %v475
    %515 = vmatprep.subr.mxu0 0.0
    %516 = vmatpush1.msra.mxu0 %v474
    %517 = vmatprep.subr.mxu0 0.0
    %518 = vmatpush1.msra.mxu0 %v473
    %519 = vmatprep.subr.mxu0 0.0
    %520 = vmatpush2.msra.mxu0 0.0
    %521 = vmatprep.subr.mxu0 0.0
    %522 = vmatpush2.msra.mxu0 0.0
    %523 = vmatprep.subr.mxu0 0.0
    %524 = vmatpush2.msra.mxu0 0.0
    %525 = vmatprep.subr.mxu0 0.0
    %526 = vmatpush2.msra.mxu0 0.0
    %527 = vmatprep.subr.mxu0 0.0
    %528 = vmatpush2.msra.mxu0 0.0
    %529 = vmatprep.subr.mxu0 0.0
    %530 = vmatpush2.msra.mxu0 0.0
    %531 = vmatprep.subr.mxu0 0.0
    %532 = vmatpush2.msra.mxu0 0.0
    %533 = vmatprep.subr.mxu0 0.0
    %534 = vmatpush2.msra.mxu0 0.0
    %535 = vmatprep.subr.mxu0 0.0
    %536 = vmatpush2.msra.mxu0 0.0
    %537 = vmatprep.subr.mxu0 0.0
    %538 = vmatpush2.msra.mxu0 0.0
    %539 = vmatprep.subr.mxu0 0.0
    %540 = vmatpush2.msra.mxu0 0.0
    %541 = vmatprep.subr.mxu0 0.0
    %542 = vmatpush2.msra.mxu0 0.0
    %543 = vmatprep.subr.mxu0 0.0
    %544 = vmatpush2.msra.mxu0 0.0
    %545 = vmatprep.subr.mxu0 0.0
    %546 = vmatpush2.msra.mxu0 0.0
    %547 = vmatprep.subr.mxu0 0.0
    %548 = vmatpush2.msra.mxu0 0.0
    %549 = vmatprep.subr.mxu0 0.0
    %550 = vmatpush2.msra.mxu0 0.0
    %551 = vmatprep.mubr.f32.mxu0 0.0
    %552 = vmatmul.mubr.f32.gmra.mxu0 %v482
    %v553 = vpop.f32.mrf.mxu0
    %v554 = vadd.f32 %v480, %v553
    %v555 = vpop.f32.mrf.mxu0
    %556 = vmatprep.mubr.f32.mxu0 0.0
    %557 = vmatmul.mubr.f32.gmra.mxu0 %v485
    %v558 = vpop.f32.mrf.mxu0
    %v559 = vadd.f32 %v480, %v558
    %v560 = vpop.f32.mrf.mxu0
    %561 = vdwg.mxu0
    %v562 = vmul.f32 %v554, 0.5
    %v563 = vmul.f32 %v559, 0.5
    %v564 = vmul.f32 %v554, 0.70710677
    %v565 = vmul.f32 %v559, 0.70710677
    %v566 = vand.u32 2147483647, %v564
    %v567 = vand.u32 2147483647, %v565
    %v568 = vmul.f32 %v566, 0.3275911
    %v569 = vmul.f32 %v567, 0.3275911
    %v570 = vadd.f32 %v568, 1.0
    %v571 = vadd.f32 %v569, 1.0
    %v572 = vrcp.pop %v570
    %v573 = vrcp.pop %v571
    %v574 = vmul.f32 %v572, 1.0614054
    %v575 = vmul.f32 %v573, 1.0614054
    %v576 = vadd.f32 %v574, -1.4531521
    %v577 = vadd.f32 %v575, -1.4531521
    %v578 = vmul.f32 %v572, %v576
    %v579 = vmul.f32 %v573, %v577
    %v580 = vadd.f32 %v578, 1.4214138
    %v581 = vadd.f32 %v579, 1.4214138
    %v582 = vmul.f32 %v572, %v580
    %v583 = vmul.f32 %v573, %v581
    %v584 = vadd.f32 %v582, -0.28449672
    %v585 = vadd.f32 %v583, -0.28449672
    %v586 = vmul.f32 %v572, %v584
    %v587 = vmul.f32 %v573, %v585
    %v588 = vadd.f32 %v586, 0.2548296
    %v589 = vadd.f32 %v587, 0.2548296
    %v590 = vmul.f32 %v572, %v588
    %v591 = vmul.f32 %v573, %v589
    %v592 = vsub.f32 0.0, %v566
    %v593 = vsub.f32 0.0, %v567
    %v594 = vmul.f32 %v592, %v566
    %v595 = vmul.f32 %v593, %v567
    %v596 = vmul.f32 %v594, 1.442695
    %v597 = vpow.pop %v596
    %v598 = vmul.f32 %v595, 1.442695
    %v599 = vpow.pop %v598
    %v600 = vmul.f32 %v590, %v597
    %v601 = vmul.f32 %v591, %v599
    %v602 = vsub.f32 1.0, %v600
    %v603 = vsub.f32 1.0, %v601
    %vm604 = vcmp.ge.f32.partialorder %v564, 0.0
    %vm605 = vcmp.ge.f32.partialorder %v565, 0.0
    %v606 = vsub.f32 0.0, %v602
    %v607 = vsub.f32 0.0, %v603
    %v608 = vsel %vm604, %v602, %v606
    %v609 = vsel %vm605, %v603, %v607
    %v610 = vadd.f32 %v608, 1.0
    %v611 = vadd.f32 %v609, 1.0
    %v612 = vmul.f32 %v562, %v610
    %v613 = vmul.f32 %v563, %v611
    %v614 = vld [vmem:[%s2] sm:$0xff]
    %v615 = vld [vmem:[%s2 + $0x8] sm:$0xff]
    %v616 = vld [vmem:[%s2 + $0x10] sm:$0xff]
    %v617 = vld [vmem:[%s2 + $0x18] sm:$0xff]
    %v618 = vld [vmem:[%s2 + $0x20] sm:$0xff]
    %v619 = vld [vmem:[%s2 + $0x28] sm:$0xff]
    %v620 = vld [vmem:[%s2 + $0x30] sm:$0xff]
    %v621 = vld [vmem:[%s2 + $0x38] sm:$0xff]
    %v622 = vlaneseq
    %v623 = vshrl.u32 %v622, 7
    %v624 = vsub.s32 0, %v623
    %v625 = vrot.slane %v25, %v624
    %vm626 = vcmask 523264
    %v628 = vsel %vm626, %v612, 0
    %v631 = vsel %vm626, %v613, 0
    %633 = vmatprep.subr.mxu0 0.0
    %634 = vmatpush1.msra.mxu0 0.0
    %635 = vmatprep.subr.mxu0 0.0
    %636 = vmatpush1.msra.mxu0 0.0
    %637 = vmatprep.subr.mxu0 0.0
    %638 = vmatpush1.msra.mxu0 0.0
    %639 = vmatprep.subr.mxu0 0.0
    %640 = vmatpush1.msra.mxu0 0.0
    %641 = vmatprep.subr.mxu0 0.0
    %642 = vmatpush1.msra.mxu0 0.0
    %643 = vmatprep.subr.mxu0 0.0
    %644 = vmatpush1.msra.mxu0 0.0
    %645 = vmatprep.subr.mxu0 0.0
    %646 = vmatpush1.msra.mxu0 0.0
    %647 = vmatprep.subr.mxu0 0.0
    %648 = vmatpush1.msra.mxu0 0.0
    %649 = vmatprep.subr.mxu0 0.0
    %650 = vmatpush1.msra.mxu0 %v621
    %651 = vmatprep.subr.mxu0 0.0
    %652 = vmatpush1.msra.mxu0 %v620
    %653 = vmatprep.subr.mxu0 0.0
    %654 = vmatpush1.msra.mxu0 %v619
    %655 = vmatprep.subr.mxu0 0.0
    %656 = vmatpush1.msra.mxu0 %v618
    %657 = vmatprep.subr.mxu0 0.0
    %658 = vmatpush1.msra.mxu0 %v617
    %659 = vmatprep.subr.mxu0 0.0
    %660 = vmatpush1.msra.mxu0 %v616
    %661 = vmatprep.subr.mxu0 0.0
    %662 = vmatpush1.msra.mxu0 %v615
    %663 = vmatprep.subr.mxu0 0.0
    %664 = vmatpush1.msra.mxu0 %v614
    %665 = vmatprep.subr.mxu0 0.0
    %666 = vmatpush2.msra.mxu0 0.0
    %667 = vmatprep.subr.mxu0 0.0
    %668 = vmatpush2.msra.mxu0 0.0
    %669 = vmatprep.subr.mxu0 0.0
    %670 = vmatpush2.msra.mxu0 0.0
    %671 = vmatprep.subr.mxu0 0.0
    %672 = vmatpush2.msra.mxu0 0.0
    %673 = vmatprep.subr.mxu0 0.0
    %674 = vmatpush2.msra.mxu0 0.0
    %675 = vmatprep.subr.mxu0 0.0
    %676 = vmatpush2.msra.mxu0 0.0
    %677 = vmatprep.subr.mxu0 0.0
    %678 = vmatpush2.msra.mxu0 0.0
    %679 = vmatprep.subr.mxu0 0.0
    %680 = vmatpush2.msra.mxu0 0.0
    %681 = vmatprep.subr.mxu0 0.0
    %682 = vmatpush2.msra.mxu0 0.0
    %683 = vmatprep.subr.mxu0 0.0
    %684 = vmatpush2.msra.mxu0 0.0
    %685 = vmatprep.subr.mxu0 0.0
    %686 = vmatpush2.msra.mxu0 0.0
    %687 = vmatprep.subr.mxu0 0.0
    %688 = vmatpush2.msra.mxu0 0.0
    %689 = vmatprep.subr.mxu0 0.0
    %690 = vmatpush2.msra.mxu0 0.0
    %691 = vmatprep.subr.mxu0 0.0
    %692 = vmatpush2.msra.mxu0 0.0
    %693 = vmatprep.subr.mxu0 0.0
    %694 = vmatpush2.msra.mxu0 0.0
    %695 = vmatprep.subr.mxu0 0.0
    %696 = vmatpush2.msra.mxu0 0.0
    %697 = vmatprep.mubr.f32.mxu0 0.0
    %698 = vmatmul.mubr.f32.gmra.mxu0 %v628
    %v699 = vpop.f32.mrf.mxu0
    %v700 = vadd.f32 %v625, %v699
    %v701 = vpop.f32.mrf.mxu0
    %702 = vmatprep.mubr.f32.mxu0 0.0
    %703 = vmatmul.mubr.f32.gmra.mxu0 %v631
    %v704 = vpop.f32.mrf.mxu0
    %v705 = vadd.f32 %v625, %v704
    %v706 = vpop.f32.mrf.mxu0
    %707 = vdwg.mxu0
    %v708 = vadd.f32 %v471, %v700
    %v709 = vadd.f32 %v472, %v705
    %v710 = vsel %vm36, %v708, 0.0
    %711 = vadd.xlane.f32.xlu0 %v710
    %v712 = vpop.xlane.xlu0 %711
    %v713 = vsel %vm36, %v709, 0.0
    %714 = vadd.xlane.f32.xlu0 %v713
    %v715 = vpop.xlane.xlu0 %714
    %v716 = vmul.f32 %v712, %v440
    %v717 = vmul.f32 %v715, %v440
    %v718 = vsub.f32 %v708, %v716
    %v719 = vsub.f32 %v709, %v717
    %v720 = vmul.f32 %v718, %v718
    %v721 = vmul.f32 %v719, %v719
    %v722 = vsel %vm36, %v720, 0.0
    %723 = vadd.xlane.f32.xlu0 %v722
    %v724 = vpop.xlane.xlu0 %723
    %v725 = vsel %vm36, %v721, 0.0
    %726 = vadd.xlane.f32.xlu0 %v725
    %v727 = vpop.xlane.xlu0 %726
    %v728 = vmul.f32 %v724, %v440
    %v729 = vmul.f32 %v727, %v440
    %v730 = vadd.f32 %v728, 1e-05
    %v731 = vadd.f32 %v729, 1e-05
    %v732 = vrsqrt.pop %v730
    %v733 = vrsqrt.pop %v731
    %v734 = vmul.f32 %v718, %v732
    %v735 = vmul.f32 %v719, %v733
    %v736 = vlaneseq
    %v737 = vshrl.u32 %v736, 7
    %v738 = vsub.s32 0, %v737
    %v739 = vrot.slane %v26, %v738
    %v740 = vmul.f32 %v734, %v739
    %v741 = vmul.f32 %v735, %v739
    %v742 = vlaneseq
    %v743 = vshrl.u32 %v742, 7
    %v744 = vsub.s32 0, %v743
    %v745 = vrot.slane %v27, %v744
    %v746 = vadd.f32 %v740, %v745
    %v747 = vadd.f32 %v741, %v745
    %748 = vst.msk [vmem:[#allocation2] sm:$0xff] %vm36, %v746
    %749 = vst.msk [vmem:[#allocation2 + $0x8] sm:$0xff] %vm36, %v747
    // Predicated region
    $region18: #{transformer_block_forward.1} parent=1 // pred_check
      _
    $region19: #{transformer_block_forward.1} parent=1 // pred_check_branch
      %751 = sbr.rel (0) target = $region21
    $region20: #{transformer_block_forward.1} parent=1 // pred_region
      %s753 = ssub.s32 256, 256
      %754 = vsyncadd [#allocation3], %s753
      %s755 = sshll.u32 [#allocation2], 4
      %s756 = int_to_ptr.vmem [resolvable:$true] %s755
      %761 = dma.vmem_to_hbm [thread:$0]  %s756, 256, %s4, [#allocation3], 128, 128, 8
    $region21: #{transformer_block_forward.1} parent=1 // pred_fallthru
      _
    // Predicated region
    $region22: #{transformer_block_forward.1} parent=1 // pred_check
      _
    $region23: #{transformer_block_forward.1} parent=1 // pred_check_branch
      %763 = sbr.rel (0) target = $region25
    $region24: #{transformer_block_forward.1} parent=1 // pred_region
      %764 = dma.done [#allocation3], 256
    $region25: #{transformer_block_forward.1} parent=1 // pred_fallthru
      _
    %765 = vsyncpa [#allocation3], 1

</llo_original>
